<compile_context>
chip_gen: v7x
topology: tpu7x:2x2x1
jax: 0.10.0
libtpu: 0.0.40
codegen_flags: <defaults>
</compile_context>

<pallas_src>
import functools

import jax
import jax.numpy as jnp
from jax.experimental import pallas as pl
from jax.experimental.pallas import tpu as pltpu


def mlp_decoder_kernel(z_ref, w1_ref, b1_ref, w2_ref, b2_ref, o_ref):
    # First layer: (tm, Cin) @ (Cin, H) on the MXU, f32 accumulate.
    h = jnp.dot(z_ref[...], w1_ref[...], preferred_element_type=jnp.float32)
    h = jnp.maximum(h + b1_ref[...], 0.0)              # bias + ReLU on the VPU
    # Second layer: (tm, H) @ (H, Cout).
    o = jnp.dot(h, w2_ref[...], preferred_element_type=jnp.float32)
    o_ref[...] = (o + b2_ref[...]).astype(o_ref.dtype)


@functools.partial(jax.jit, static_argnames=("tm",))
def mlp_decoder(z, w1, b1, w2, b2, *, tm=1024):
    """z: [N, Cin], w1: [Cin, H], b1: [1, H], w2: [H, Cout], b2: [1, Cout]."""
    N, Cin = z.shape
    H = w1.shape[1]
    Cout = w2.shape[1]

    # Single step when N fits in one tile (v5e/v6e have one TensorCore, so a
    # multi-step grid is pure overhead at small N); otherwise 1K-row tiles.
    tm_eff = min(tm, N)
    grid = (pl.cdiv(N, tm_eff),)

    return pl.pallas_call(
        mlp_decoder_kernel,
        out_shape=jax.ShapeDtypeStruct((N, Cout), z.dtype),
        grid_spec=pltpu.PrefetchScalarGridSpec(
            num_scalar_prefetch=0,
            grid=grid,
            in_specs=[
                pl.BlockSpec((tm_eff, Cin), lambda i: (i, 0)),  # z row tile
                pl.BlockSpec((Cin, H), lambda i: (0, 0)),       # W1 (resident)
                pl.BlockSpec((1, H), lambda i: (0, 0)),         # b1 (resident)
                pl.BlockSpec((H, Cout), lambda i: (0, 0)),      # W2 (resident)
                pl.BlockSpec((1, Cout), lambda i: (0, 0)),      # b2 (resident)
            ],
            out_specs=pl.BlockSpec((tm_eff, Cout), lambda i: (i, 0)),
        ),
        compiler_params=pltpu.CompilerParams(
            # Row tiles are independent; "parallel" when there is >1 step.
            dimension_semantics=("arbitrary",) if grid[0] == 1 else ("parallel",),
        ),
    )(z, w1, b1, w2, b2)


def reference(z, w1, b1, w2, b2):
    h = jnp.maximum(z @ w1 + b1, 0.0)
    return h @ w2 + b2


if __name__ == "__main__":
    # MLPDecoder(in_channels=16, out_channels=48, hidden_channels=64).
    N = 512
    IN_CHANNELS = 16
    HIDDEN = 64
    OUT_CHANNELS = 48

    key = jax.random.PRNGKey(0)
    kz, k1, k2, k3, k4 = jax.random.split(key, 5)

    z = jax.random.normal(kz, (N, IN_CHANNELS), dtype=jnp.float32)
    # nn.Linear weights, pre-transposed to [in, out]; biases as [1, out].
    w1 = jax.random.normal(k1, (IN_CHANNELS, HIDDEN), dtype=jnp.float32) * 0.1
    b1 = jax.random.normal(k2, (1, HIDDEN), dtype=jnp.float32) * 0.1
    w2 = jax.random.normal(k3, (HIDDEN, OUT_CHANNELS), dtype=jnp.float32) * 0.1
    b2 = jax.random.normal(k4, (1, OUT_CHANNELS), dtype=jnp.float32) * 0.1

    out = mlp_decoder(z, w1, b1, w2, b2)
    out = jax.block_until_ready(out)

    ref = reference(z, w1, b1, w2, b2)
    assert out.shape == (N, OUT_CHANNELS)
    # f32 MXU matmuls -> tight tolerance vs. the f32 reference.
    assert jnp.allclose(out, ref, atol=1e-2, rtol=1e-2)

    print("KERNEL_OK")
</pallas_src>

<mosaic_0001>
module attributes {stable_mosaic.version = 11 : i64} {
  func.func @mlp_decoder_kernel(%arg0: i32, %arg1: memref<512x16xf32, #tpu.memory_space<vmem>>, %arg2: memref<16x64xf32, #tpu.memory_space<vmem>>, %arg3: memref<1x64xf32, #tpu.memory_space<vmem>>, %arg4: memref<64x48xf32, #tpu.memory_space<vmem>>, %arg5: memref<1x48xf32, #tpu.memory_space<vmem>>, %arg6: memref<512x48xf32, #tpu.memory_space<vmem>>) attributes {dimension_semantics = [#tpu.dimension_semantics<arbitrary>], iteration_bounds = array<i64: 1>, scalar_prefetch = 0 : i64, scratch_operands = 0 : i64, tpu.core_type = #tpu.core_type<tc>, window_params = [{transform_indices = @transform_0, window_bounds = array<i64: 512, 16>}, {pipeline_mode = #tpu.pipeline_mode<synchronous>, transform_indices = @transform_1, window_bounds = array<i64: 16, 64>}, {pipeline_mode = #tpu.pipeline_mode<synchronous>, transform_indices = @transform_2, window_bounds = array<i64: 1, 64>}, {pipeline_mode = #tpu.pipeline_mode<synchronous>, transform_indices = @transform_3, window_bounds = array<i64: 64, 48>}, {pipeline_mode = #tpu.pipeline_mode<synchronous>, transform_indices = @transform_4, window_bounds = array<i64: 1, 48>}, {transform_indices = @transform_5, window_bounds = array<i64: 512, 48>}]} {
    %c0 = arith.constant 0 : index
    %c0_0 = arith.constant 0 : index
    %0 = vector.load %arg1[%c0, %c0_0] : memref<512x16xf32, #tpu.memory_space<vmem>>, vector<512x16xf32>
    %c0_1 = arith.constant 0 : index
    %c0_2 = arith.constant 0 : index
    %1 = vector.load %arg2[%c0_1, %c0_2] : memref<16x64xf32, #tpu.memory_space<vmem>>, vector<16x64xf32>
    %cst = arith.constant dense<0.000000e+00> : vector<512x64xf32>
    %2 = tpu.matmul %0, %1, %cst {dimension_numbers = #tpu.dot_dimension_numbers<[1], [0], [0], [1], [0, 0, 1, 1], [], []>} : vector<512x16xf32>, vector<16x64xf32>, vector<512x64xf32> -> vector<512x64xf32>
    %c0_3 = arith.constant 0 : index
    %c0_4 = arith.constant 0 : index
    %3 = vector.load %arg3[%c0_3, %c0_4] : memref<1x64xf32, #tpu.memory_space<vmem>>, vector<1x64xf32>
    %4 = vector.broadcast %3 : vector<1x64xf32> to vector<512x64xf32>
    %5 = arith.addf %2, %4 : vector<512x64xf32>
    %cst_5 = arith.constant 0.000000e+00 : f32
    %6 = vector.broadcast %cst_5 : f32 to vector<512x64xf32>
    %7 = arith.maximumf %5, %6 : vector<512x64xf32>
    %c0_6 = arith.constant 0 : index
    %c0_7 = arith.constant 0 : index
    %8 = vector.load %arg4[%c0_6, %c0_7] : memref<64x48xf32, #tpu.memory_space<vmem>>, vector<64x48xf32>
    %cst_8 = arith.constant dense<0.000000e+00> : vector<512x48xf32>
    %9 = tpu.matmul %7, %8, %cst_8 {dimension_numbers = #tpu.dot_dimension_numbers<[1], [0], [0], [1], [0, 0, 1, 1], [], []>} : vector<512x64xf32>, vector<64x48xf32>, vector<512x48xf32> -> vector<512x48xf32>
    %c0_9 = arith.constant 0 : index
    %c0_10 = arith.constant 0 : index
    %10 = vector.load %arg5[%c0_9, %c0_10] : memref<1x48xf32, #tpu.memory_space<vmem>>, vector<1x48xf32>
    %11 = vector.broadcast %10 : vector<1x48xf32> to vector<512x48xf32>
    %12 = arith.addf %9, %11 : vector<512x48xf32>
    %c0_11 = arith.constant 0 : index
    %c0_12 = arith.constant 0 : index
    %13 = vector.load %arg6[%c0_11, %c0_12] : memref<512x48xf32, #tpu.memory_space<vmem>>, vector<512x48xf32>
    tpu.vector_store %arg6[%c0_11, %c0_12], %12 {strides = array<i32>} : memref<512x48xf32, #tpu.memory_space<vmem>>, vector<512x48xf32>,
    return
  }
  func.func @transform_0(%arg0: i32) -> (i32, i32) {
    %c0_i32 = arith.constant 0 : i32
    %c0_i32_0 = arith.constant 0 : i32
    return %arg0, %c0_i32 : i32, i32
  }
  func.func @transform_1(%arg0: i32) -> (i32, i32) {
    %c0_i32 = arith.constant 0 : i32
    %c0_i32_0 = arith.constant 0 : i32
    %c0_i32_1 = arith.constant 0 : i32
    return %c0_i32, %c0_i32_0 : i32, i32
  }
  func.func @transform_2(%arg0: i32) -> (i32, i32) {
    %c0_i32 = arith.constant 0 : i32
    %c0_i32_0 = arith.constant 0 : i32
    %c0_i32_1 = arith.constant 0 : i32
    return %c0_i32, %c0_i32_0 : i32, i32
  }
  func.func @transform_3(%arg0: i32) -> (i32, i32) {
    %c0_i32 = arith.constant 0 : i32
    %c0_i32_0 = arith.constant 0 : i32
    %c0_i32_1 = arith.constant 0 : i32
    return %c0_i32, %c0_i32_0 : i32, i32
  }
  func.func @transform_4(%arg0: i32) -> (i32, i32) {
    %c0_i32 = arith.constant 0 : i32
    %c0_i32_0 = arith.constant 0 : i32
    %c0_i32_1 = arith.constant 0 : i32
    return %c0_i32, %c0_i32_0 : i32, i32
  }
  func.func @transform_5(%arg0: i32) -> (i32, i32) {
    %c0_i32 = arith.constant 0 : i32
    %c0_i32_0 = arith.constant 0 : i32
    return %arg0, %c0_i32 : i32, i32
  }
}

</mosaic_0001>

<llo_original>
// kernel: mlp_decoder.1
$region0: #{mlp_decoder.1}
  #allocation0 [shape = 'u32[]', space=smem, size = 0x4, offset = 0x4, fixed_abs, tag = 'smem constant byte address 0x4 - core index']
  #allocation1 [shape = 'u32[144,128]{1,0:T(1,128)}', space=vmem, size = 0x12000, scoped, tag = 'internal scratch']
  %s0 = inlined_call_operand.vmem [shape: f32[512,16], index: 0, kind: input, shape index: {}]
  %s1 = inlined_call_operand.vmem [shape: f32[16,64], index: 1, kind: input, shape index: {}]
  %s2 = inlined_call_operand.vmem [shape: f32[1,64], index: 2, kind: input, shape index: {}]
  %s3 = inlined_call_operand.vmem [shape: f32[64,48], index: 3, kind: input, shape index: {}]
  %s4 = inlined_call_operand.vmem [shape: f32[1,48], index: 4, kind: input, shape index: {}]
  %s5 = inlined_call_operand.vmem [shape: f32[512,48], index: 5, kind: output, shape index: {}]
  %s6 = sld [smem:[#allocation0]]
  $region30: #{mlp_decoder.1} parent=0
    _
  %s8 = ssub.s32 1, %s6
  %s9 = scalar_select 0, %s8, %s6
  // Predicated region
  $region2: #{mlp_decoder.1} parent=0 // pred_check
    _
  $region3: #{mlp_decoder.1} parent=0 // pred_check_branch
    %11 = sbr.rel (0) target = $region5
  $region4: #{mlp_decoder.1} parent=0 // pred_region
    _
  $region5: #{mlp_decoder.1} parent=0 // pred_fallthru
    _
  // Predicated region
  $region6: #{mlp_decoder.1} parent=0 // pred_check
    _
  $region7: #{mlp_decoder.1} parent=0 // pred_check_branch
    %13 = sbr.rel (0) target = $region9
  $region8: #{mlp_decoder.1} parent=0 // pred_region
    _
  $region9: #{mlp_decoder.1} parent=0 // pred_fallthru
    _
  // Predicated region
  $region10: #{mlp_decoder.1} parent=0 // pred_check
    _
  $region11: #{mlp_decoder.1} parent=0 // pred_check_branch
    %15 = sbr.rel (0) target = $region13
  $region12: #{mlp_decoder.1} parent=0 // pred_region
    _
  $region13: #{mlp_decoder.1} parent=0 // pred_fallthru
    _
  // Predicated region
  $region14: #{mlp_decoder.1} parent=0 // pred_check
    _
  $region15: #{mlp_decoder.1} parent=0 // pred_check_branch
    %17 = sbr.rel (0) target = $region17
  $region16: #{mlp_decoder.1} parent=0 // pred_region
    _
  $region17: #{mlp_decoder.1} parent=0 // pred_fallthru
    _
  // Predicated region
  $region18: #{mlp_decoder.1} parent=0 // pred_check
    _
  $region19: #{mlp_decoder.1} parent=0 // pred_check_branch
    %19 = sbr.rel (0) target = $region21
  $region20: #{mlp_decoder.1} parent=0 // pred_region
    _
  $region21: #{mlp_decoder.1} parent=0 // pred_fallthru
    _
  %v20 = vld [vmem:[%s0] sm:$0xff]
  %v21 = vld [vmem:[%s0 + $0x8] sm:$0xff]
  %v22 = vld [vmem:[%s0 + $0x10] sm:$0xff]
  %v23 = vld [vmem:[%s0 + $0x18] sm:$0xff]
  %v24 = vld [vmem:[%s0 + $0x20] sm:$0xff]
  %v25 = vld [vmem:[%s0 + $0x28] sm:$0xff]
  %v26 = vld [vmem:[%s0 + $0x30] sm:$0xff]
  %v27 = vld [vmem:[%s0 + $0x38] sm:$0xff]
  %v28 = vld [vmem:[%s0 + $0x40] sm:$0xff]
  %v29 = vld [vmem:[%s0 + $0x48] sm:$0xff]
  %v30 = vld [vmem:[%s0 + $0x50] sm:$0xff]
  %v31 = vld [vmem:[%s0 + $0x58] sm:$0xff]
  %v32 = vld [vmem:[%s0 + $0x60] sm:$0xff]
  %v33 = vld [vmem:[%s0 + $0x68] sm:$0xff]
  %v34 = vld [vmem:[%s0 + $0x70] sm:$0xff]
  %v35 = vld [vmem:[%s0 + $0x78] sm:$0xff]
  %v36 = vld [vmem:[%s0 + $0x80] sm:$0xff]
  %v37 = vld [vmem:[%s0 + $0x88] sm:$0xff]
  %v38 = vld [vmem:[%s0 + $0x90] sm:$0xff]
  %v39 = vld [vmem:[%s0 + $0x98] sm:$0xff]
  %v40 = vld [vmem:[%s0 + $0xa0] sm:$0xff]
  %v41 = vld [vmem:[%s0 + $0xa8] sm:$0xff]
  %v42 = vld [vmem:[%s0 + $0xb0] sm:$0xff]
  %v43 = vld [vmem:[%s0 + $0xb8] sm:$0xff]
  %v44 = vld [vmem:[%s0 + $0xc0] sm:$0xff]
  %v45 = vld [vmem:[%s0 + $0xc8] sm:$0xff]
  %v46 = vld [vmem:[%s0 + $0xd0] sm:$0xff]
  %v47 = vld [vmem:[%s0 + $0xd8] sm:$0xff]
  %v48 = vld [vmem:[%s0 + $0xe0] sm:$0xff]
  %v49 = vld [vmem:[%s0 + $0xe8] sm:$0xff]
  %v50 = vld [vmem:[%s0 + $0xf0] sm:$0xff]
  %v51 = vld [vmem:[%s0 + $0xf8] sm:$0xff]
  %v52 = vld [vmem:[%s0 + $0x100] sm:$0xff]
  %v53 = vld [vmem:[%s0 + $0x108] sm:$0xff]
  %v54 = vld [vmem:[%s0 + $0x110] sm:$0xff]
  %v55 = vld [vmem:[%s0 + $0x118] sm:$0xff]
  %v56 = vld [vmem:[%s0 + $0x120] sm:$0xff]
  %v57 = vld [vmem:[%s0 + $0x128] sm:$0xff]
  %v58 = vld [vmem:[%s0 + $0x130] sm:$0xff]
  %v59 = vld [vmem:[%s0 + $0x138] sm:$0xff]
  %v60 = vld [vmem:[%s0 + $0x140] sm:$0xff]
  %v61 = vld [vmem:[%s0 + $0x148] sm:$0xff]
  %v62 = vld [vmem:[%s0 + $0x150] sm:$0xff]
  %v63 = vld [vmem:[%s0 + $0x158] sm:$0xff]
  %v64 = vld [vmem:[%s0 + $0x160] sm:$0xff]
  %v65 = vld [vmem:[%s0 + $0x168] sm:$0xff]
  %v66 = vld [vmem:[%s0 + $0x170] sm:$0xff]
  %v67 = vld [vmem:[%s0 + $0x178] sm:$0xff]
  %v68 = vld [vmem:[%s0 + $0x180] sm:$0xff]
  %v69 = vld [vmem:[%s0 + $0x188] sm:$0xff]
  %v70 = vld [vmem:[%s0 + $0x190] sm:$0xff]
  %v71 = vld [vmem:[%s0 + $0x198] sm:$0xff]
  %v72 = vld [vmem:[%s0 + $0x1a0] sm:$0xff]
  %v73 = vld [vmem:[%s0 + $0x1a8] sm:$0xff]
  %v74 = vld [vmem:[%s0 + $0x1b0] sm:$0xff]
  %v75 = vld [vmem:[%s0 + $0x1b8] sm:$0xff]
  %v76 = vld [vmem:[%s0 + $0x1c0] sm:$0xff]
  %v77 = vld [vmem:[%s0 + $0x1c8] sm:$0xff]
  %v78 = vld [vmem:[%s0 + $0x1d0] sm:$0xff]
  %v79 = vld [vmem:[%s0 + $0x1d8] sm:$0xff]
  %v80 = vld [vmem:[%s0 + $0x1e0] sm:$0xff]
  %v81 = vld [vmem:[%s0 + $0x1e8] sm:$0xff]
  %v82 = vld [vmem:[%s0 + $0x1f0] sm:$0xff]
  %v83 = vld [vmem:[%s0 + $0x1f8] sm:$0xff]
  %v84 = vld [vmem:[%s1] sm:$0xff]
  %v85 = vld [vmem:[%s1 + $0x8] sm:$0xff]
  %v86 = vld [vmem:[%s2] sm:$0x1]
  %v88 = vlaneseq
  %v89 = vshrl.u32 %v88, 7
  %v90 = vsub.s32 0, %v89
  %v91 = vrot.slane %v86, %v90
  %vm93 = vcmask 130048
  %v95 = vsel %vm93, %v20, 0
  %v98 = vsel %vm93, %v21, 0
  %v101 = vsel %vm93, %v22, 0
  %v104 = vsel %vm93, %v23, 0
  %v107 = vsel %vm93, %v24, 0
  %v110 = vsel %vm93, %v25, 0
  %v113 = vsel %vm93, %v26, 0
  %v116 = vsel %vm93, %v27, 0
  %v119 = vsel %vm93, %v28, 0
  %v122 = vsel %vm93, %v29, 0
  %v125 = vsel %vm93, %v30, 0
  %v128 = vsel %vm93, %v31, 0
  %v131 = vsel %vm93, %v32, 0
  %v134 = vsel %vm93, %v33, 0
  %v137 = vsel %vm93, %v34, 0
  %v140 = vsel %vm93, %v35, 0
  %v143 = vsel %vm93, %v36, 0
  %v146 = vsel %vm93, %v37, 0
  %v149 = vsel %vm93, %v38, 0
  %v152 = vsel %vm93, %v39, 0
  %v155 = vsel %vm93, %v40, 0
  %v158 = vsel %vm93, %v41, 0
  %v161 = vsel %vm93, %v42, 0
  %v164 = vsel %vm93, %v43, 0
  %v167 = vsel %vm93, %v44, 0
  %v170 = vsel %vm93, %v45, 0
  %v173 = vsel %vm93, %v46, 0
  %v176 = vsel %vm93, %v47, 0
  %v179 = vsel %vm93, %v48, 0
  %v182 = vsel %vm93, %v49, 0
  %v185 = vsel %vm93, %v50, 0
  %v188 = vsel %vm93, %v51, 0
  %v191 = vsel %vm93, %v52, 0
  %v194 = vsel %vm93, %v53, 0
  %v197 = vsel %vm93, %v54, 0
  %v200 = vsel %vm93, %v55, 0
  %v203 = vsel %vm93, %v56, 0
  %v206 = vsel %vm93, %v57, 0
  %v209 = vsel %vm93, %v58, 0
  %v212 = vsel %vm93, %v59, 0
  %v215 = vsel %vm93, %v60, 0
  %v218 = vsel %vm93, %v61, 0
  %v221 = vsel %vm93, %v62, 0
  %v224 = vsel %vm93, %v63, 0
  %v227 = vsel %vm93, %v64, 0
  %v230 = vsel %vm93, %v65, 0
  %v233 = vsel %vm93, %v66, 0
  %v236 = vsel %vm93, %v67, 0
  %v239 = vsel %vm93, %v68, 0
  %v242 = vsel %vm93, %v69, 0
  %v245 = vsel %vm93, %v70, 0
  %v248 = vsel %vm93, %v71, 0
  %v251 = vsel %vm93, %v72, 0
  %v254 = vsel %vm93, %v73, 0
  %v257 = vsel %vm93, %v74, 0
  %v260 = vsel %vm93, %v75, 0
  %v263 = vsel %vm93, %v76, 0
  %v266 = vsel %vm93, %v77, 0
  %v269 = vsel %vm93, %v78, 0
  %v272 = vsel %vm93, %v79, 0
  %v275 = vsel %vm93, %v80, 0
  %v278 = vsel %vm93, %v81, 0
  %v281 = vsel %vm93, %v82, 0
  %v284 = vsel %vm93, %v83, 0
  %286 = vmatprep.subr.mxu0 0.0
  %287 = vmatpush1.msra.mxu0 %v84
  %288 = vmatprep.subr.mxu0 0.0
  %289 = vmatpush1.msra.mxu0 %v85
  %290 = vmatprep.subr.mxu0 0.0
  %291 = vmatpush1.msra.mxu0 0.0
  %292 = vmatprep.subr.mxu0 0.0
  %293 = vmatpush1.msra.mxu0 0.0
  %294 = vmatprep.subr.mxu0 0.0
  %295 = vmatpush1.msra.mxu0 0.0
  %296 = vmatprep.subr.mxu0 0.0
  %297 = vmatpush1.msra.mxu0 0.0
  %298 = vmatprep.subr.mxu0 0.0
  %299 = vmatpush1.msra.mxu0 0.0
  %300 = vmatprep.subr.mxu0 0.0
  %301 = vmatpush1.msra.mxu0 0.0
  %302 = vmatprep.subr.mxu0 0.0
  %303 = vmatpush1.msra.mxu0 0.0
  %304 = vmatprep.subr.mxu0 0.0
  %305 = vmatpush1.msra.mxu0 0.0
  %306 = vmatprep.subr.mxu0 0.0
  %307 = vmatpush1.msra.mxu0 0.0
  %308 = vmatprep.subr.mxu0 0.0
  %309 = vmatpush1.msra.mxu0 0.0
  %310 = vmatprep.subr.mxu0 0.0
  %311 = vmatpush1.msra.mxu0 0.0
  %312 = vmatprep.subr.mxu0 0.0
  %313 = vmatpush1.msra.mxu0 0.0
  %314 = vmatprep.subr.mxu0 0.0
  %315 = vmatpush1.msra.mxu0 0.0
  %316 = vmatprep.subr.mxu0 0.0
  %317 = vmatpush1.msra.mxu0 0.0
  %318 = vmatprep.subr.mxu0 0.0
  %319 = vmatpush1.msra.mxu0 0.0
  %320 = vmatprep.subr.mxu0 0.0
  %321 = vmatpush1.msra.mxu0 0.0
  %322 = vmatprep.subr.mxu0 0.0
  %323 = vmatpush1.msra.mxu0 0.0
  %324 = vmatprep.subr.mxu0 0.0
  %325 = vmatpush1.msra.mxu0 0.0
  %326 = vmatprep.subr.mxu0 0.0
  %327 = vmatpush1.msra.mxu0 0.0
  %328 = vmatprep.subr.mxu0 0.0
  %329 = vmatpush1.msra.mxu0 0.0
  %330 = vmatprep.subr.mxu0 0.0
  %331 = vmatpush1.msra.mxu0 0.0
  %332 = vmatprep.subr.mxu0 0.0
  %333 = vmatpush1.msra.mxu0 0.0
  %334 = vmatprep.subr.mxu0 0.0
  %335 = vmatpush1.msra.mxu0 0.0
  %336 = vmatprep.subr.mxu0 0.0
  %337 = vmatpush1.msra.mxu0 0.0
  %338 = vmatprep.subr.mxu0 0.0
  %339 = vmatpush1.msra.mxu0 0.0
  %340 = vmatprep.subr.mxu0 0.0
  %341 = vmatpush1.msra.mxu0 0.0
  %342 = vmatprep.subr.mxu0 0.0
  %343 = vmatpush1.msra.mxu0 0.0
  %344 = vmatprep.subr.mxu0 0.0
  %345 = vmatpush1.msra.mxu0 0.0
  %346 = vmatprep.subr.mxu0 0.0
  %347 = vmatpush1.msra.mxu0 0.0
  %348 = vmatprep.subr.mxu0 0.0
  %349 = vmatpush1.msra.mxu0 0.0
  %350 = vmatprep.mubr.f32.mxu0 0.0
  %351 = vmatmul.mubr.f32.gmra.mrb[0].mxu0 %v95
  %v352 = vpop.f32.mrb[0].mxu0
  %v353 = vadd.f32 %v91, %v352
  %v354 = vpop.f32.mrb[0].mxu0
  %355 = vmatprep.mubr.f32.mxu0 0.0
  %356 = vmatmul.mubr.f32.gmra.mrb[0].mxu0 %v98
  %v357 = vpop.f32.mrb[0].mxu0
  %v358 = vadd.f32 %v91, %v357
  %v359 = vpop.f32.mrb[0].mxu0
  %360 = vmatprep.mubr.f32.mxu0 0.0
  %361 = vmatmul.mubr.f32.gmra.mrb[0].mxu0 %v101
  %v362 = vpop.f32.mrb[0].mxu0
  %v363 = vadd.f32 %v91, %v362
  %v364 = vpop.f32.mrb[0].mxu0
  %365 = vmatprep.mubr.f32.mxu0 0.0
  %366 = vmatmul.mubr.f32.gmra.mrb[0].mxu0 %v104
  %v367 = vpop.f32.mrb[0].mxu0
  %v368 = vadd.f32 %v91, %v367
  %v369 = vpop.f32.mrb[0].mxu0
  %370 = vmatprep.mubr.f32.mxu0 0.0
  %371 = vmatmul.mubr.f32.gmra.mrb[0].mxu0 %v107
  %v372 = vpop.f32.mrb[0].mxu0
  %v373 = vadd.f32 %v91, %v372
  %v374 = vpop.f32.mrb[0].mxu0
  %375 = vmatprep.mubr.f32.mxu0 0.0
  %376 = vmatmul.mubr.f32.gmra.mrb[0].mxu0 %v110
  %v377 = vpop.f32.mrb[0].mxu0
  %v378 = vadd.f32 %v91, %v377
  %v379 = vpop.f32.mrb[0].mxu0
  %380 = vmatprep.mubr.f32.mxu0 0.0
  %381 = vmatmul.mubr.f32.gmra.mrb[0].mxu0 %v113
  %v382 = vpop.f32.mrb[0].mxu0
  %v383 = vadd.f32 %v91, %v382
  %v384 = vpop.f32.mrb[0].mxu0
  %385 = vmatprep.mubr.f32.mxu0 0.0
  %386 = vmatmul.mubr.f32.gmra.mrb[0].mxu0 %v116
  %v387 = vpop.f32.mrb[0].mxu0
  %v388 = vadd.f32 %v91, %v387
  %v389 = vpop.f32.mrb[0].mxu0
  %390 = vmatprep.mubr.f32.mxu0 0.0
  %391 = vmatmul.mubr.f32.gmra.mrb[0].mxu0 %v119
  %v392 = vpop.f32.mrb[0].mxu0
  %v393 = vadd.f32 %v91, %v392
  %v394 = vpop.f32.mrb[0].mxu0
  %395 = vmatprep.mubr.f32.mxu0 0.0
  %396 = vmatmul.mubr.f32.gmra.mrb[0].mxu0 %v122
  %v397 = vpop.f32.mrb[0].mxu0
  %v398 = vadd.f32 %v91, %v397
  %v399 = vpop.f32.mrb[0].mxu0
  %400 = vmatprep.mubr.f32.mxu0 0.0
  %401 = vmatmul.mubr.f32.gmra.mrb[0].mxu0 %v125
  %v402 = vpop.f32.mrb[0].mxu0
  %v403 = vadd.f32 %v91, %v402
  %v404 = vpop.f32.mrb[0].mxu0
  %405 = vmatprep.mubr.f32.mxu0 0.0
  %406 = vmatmul.mubr.f32.gmra.mrb[0].mxu0 %v128
  %v407 = vpop.f32.mrb[0].mxu0
  %v408 = vadd.f32 %v91, %v407
  %v409 = vpop.f32.mrb[0].mxu0
  %410 = vmatprep.mubr.f32.mxu0 0.0
  %411 = vmatmul.mubr.f32.gmra.mrb[0].mxu0 %v131
  %v412 = vpop.f32.mrb[0].mxu0
  %v413 = vadd.f32 %v91, %v412
  %v414 = vpop.f32.mrb[0].mxu0
  %415 = vmatprep.mubr.f32.mxu0 0.0
  %416 = vmatmul.mubr.f32.gmra.mrb[0].mxu0 %v134
  %v417 = vpop.f32.mrb[0].mxu0
  %v418 = vadd.f32 %v91, %v417
  %v419 = vpop.f32.mrb[0].mxu0
  %420 = vmatprep.mubr.f32.mxu0 0.0
  %421 = vmatmul.mubr.f32.gmra.mrb[0].mxu0 %v137
  %v422 = vpop.f32.mrb[0].mxu0
  %v423 = vadd.f32 %v91, %v422
  %v424 = vpop.f32.mrb[0].mxu0
  %425 = vmatprep.mubr.f32.mxu0 0.0
  %426 = vmatmul.mubr.f32.gmra.mrb[0].mxu0 %v140
  %v427 = vpop.f32.mrb[0].mxu0
  %v428 = vadd.f32 %v91, %v427
  %v429 = vpop.f32.mrb[0].mxu0
  %430 = vmatprep.mubr.f32.mxu0 0.0
  %431 = vmatmul.mubr.f32.gmra.mrb[0].mxu0 %v143
  %v432 = vpop.f32.mrb[0].mxu0
  %v433 = vadd.f32 %v91, %v432
  %v434 = vpop.f32.mrb[0].mxu0
  %435 = vmatprep.mubr.f32.mxu0 0.0
  %436 = vmatmul.mubr.f32.gmra.mrb[0].mxu0 %v146
  %v437 = vpop.f32.mrb[0].mxu0
  %v438 = vadd.f32 %v91, %v437
  %v439 = vpop.f32.mrb[0].mxu0
  %440 = vmatprep.mubr.f32.mxu0 0.0
  %441 = vmatmul.mubr.f32.gmra.mrb[0].mxu0 %v149
  %v442 = vpop.f32.mrb[0].mxu0
  %v443 = vadd.f32 %v91, %v442
  %v444 = vpop.f32.mrb[0].mxu0
  %445 = vmatprep.mubr.f32.mxu0 0.0
  %446 = vmatmul.mubr.f32.gmra.mrb[0].mxu0 %v152
  %v447 = vpop.f32.mrb[0].mxu0
  %v448 = vadd.f32 %v91, %v447
  %v449 = vpop.f32.mrb[0].mxu0
  %450 = vmatprep.mubr.f32.mxu0 0.0
  %451 = vmatmul.mubr.f32.gmra.mrb[0].mxu0 %v155
  %v452 = vpop.f32.mrb[0].mxu0
  %v453 = vadd.f32 %v91, %v452
  %v454 = vpop.f32.mrb[0].mxu0
  %455 = vmatprep.mubr.f32.mxu0 0.0
  %456 = vmatmul.mubr.f32.gmra.mrb[0].mxu0 %v158
  %v457 = vpop.f32.mrb[0].mxu0
  %v458 = vadd.f32 %v91, %v457
  %v459 = vpop.f32.mrb[0].mxu0
  %460 = vmatprep.mubr.f32.mxu0 0.0
  %461 = vmatmul.mubr.f32.gmra.mrb[0].mxu0 %v161
  %v462 = vpop.f32.mrb[0].mxu0
  %v463 = vadd.f32 %v91, %v462
  %v464 = vpop.f32.mrb[0].mxu0
  %465 = vmatprep.mubr.f32.mxu0 0.0
  %466 = vmatmul.mubr.f32.gmra.mrb[0].mxu0 %v164
  %v467 = vpop.f32.mrb[0].mxu0
  %v468 = vadd.f32 %v91, %v467
  %v469 = vpop.f32.mrb[0].mxu0
  %470 = vmatprep.mubr.f32.mxu0 0.0
  %471 = vmatmul.mubr.f32.gmra.mrb[0].mxu0 %v167
  %v472 = vpop.f32.mrb[0].mxu0
  %v473 = vadd.f32 %v91, %v472
  %v474 = vpop.f32.mrb[0].mxu0
  %475 = vmatprep.mubr.f32.mxu0 0.0
  %476 = vmatmul.mubr.f32.gmra.mrb[0].mxu0 %v170
  %v477 = vpop.f32.mrb[0].mxu0
  %v478 = vadd.f32 %v91, %v477
  %v479 = vpop.f32.mrb[0].mxu0
  %480 = vmatprep.mubr.f32.mxu0 0.0
  %481 = vmatmul.mubr.f32.gmra.mrb[0].mxu0 %v173
  %v482 = vpop.f32.mrb[0].mxu0
  %v483 = vadd.f32 %v91, %v482
  %v484 = vpop.f32.mrb[0].mxu0
  %485 = vmatprep.mubr.f32.mxu0 0.0
  %486 = vmatmul.mubr.f32.gmra.mrb[0].mxu0 %v176
  %v487 = vpop.f32.mrb[0].mxu0
  %v488 = vadd.f32 %v91, %v487
  %v489 = vpop.f32.mrb[0].mxu0
  %490 = vmatprep.mubr.f32.mxu0 0.0
  %491 = vmatmul.mubr.f32.gmra.mrb[0].mxu0 %v179
  %v492 = vpop.f32.mrb[0].mxu0
  %v493 = vadd.f32 %v91, %v492
  %v494 = vpop.f32.mrb[0].mxu0
  %495 = vmatprep.mubr.f32.mxu0 0.0
  %496 = vmatmul.mubr.f32.gmra.mrb[0].mxu0 %v182
  %v497 = vpop.f32.mrb[0].mxu0
  %v498 = vadd.f32 %v91, %v497
  %v499 = vpop.f32.mrb[0].mxu0
  %500 = vmatprep.mubr.f32.mxu0 0.0
  %501 = vmatmul.mubr.f32.gmra.mrb[0].mxu0 %v185
  %v502 = vpop.f32.mrb[0].mxu0
  %v503 = vadd.f32 %v91, %v502
  %v504 = vpop.f32.mrb[0].mxu0
  %505 = vmatprep.mubr.f32.mxu0 0.0
  %506 = vmatmul.mubr.f32.gmra.mrb[0].mxu0 %v188
  %v507 = vpop.f32.mrb[0].mxu0
  %v508 = vadd.f32 %v91, %v507
  %v509 = vpop.f32.mrb[0].mxu0
  %510 = vmatprep.mubr.f32.mxu0 0.0
  %511 = vmatmul.mubr.f32.gmra.mrb[0].mxu0 %v191
  %v512 = vpop.f32.mrb[0].mxu0
  %v513 = vadd.f32 %v91, %v512
  %v514 = vpop.f32.mrb[0].mxu0
  %515 = vmatprep.mubr.f32.mxu0 0.0
  %516 = vmatmul.mubr.f32.gmra.mrb[0].mxu0 %v194
  %v517 = vpop.f32.mrb[0].mxu0
  %v518 = vadd.f32 %v91, %v517
  %v519 = vpop.f32.mrb[0].mxu0
  %520 = vmatprep.mubr.f32.mxu0 0.0
  %521 = vmatmul.mubr.f32.gmra.mrb[0].mxu0 %v197
  %v522 = vpop.f32.mrb[0].mxu0
  %v523 = vadd.f32 %v91, %v522
  %v524 = vpop.f32.mrb[0].mxu0
  %525 = vmatprep.mubr.f32.mxu0 0.0
  %526 = vmatmul.mubr.f32.gmra.mrb[0].mxu0 %v200
  %v527 = vpop.f32.mrb[0].mxu0
  %v528 = vadd.f32 %v91, %v527
  %v529 = vpop.f32.mrb[0].mxu0
  %530 = vmatprep.mubr.f32.mxu0 0.0
  %531 = vmatmul.mubr.f32.gmra.mrb[0].mxu0 %v203
  %v532 = vpop.f32.mrb[0].mxu0
  %v533 = vadd.f32 %v91, %v532
  %v534 = vpop.f32.mrb[0].mxu0
  %535 = vmatprep.mubr.f32.mxu0 0.0
  %536 = vmatmul.mubr.f32.gmra.mrb[0].mxu0 %v206
  %v537 = vpop.f32.mrb[0].mxu0
  %v538 = vadd.f32 %v91, %v537
  %v539 = vpop.f32.mrb[0].mxu0
  %540 = vmatprep.mubr.f32.mxu0 0.0
  %541 = vmatmul.mubr.f32.gmra.mrb[0].mxu0 %v209
  %v542 = vpop.f32.mrb[0].mxu0
  %v543 = vadd.f32 %v91, %v542
  %v544 = vpop.f32.mrb[0].mxu0
  %545 = vmatprep.mubr.f32.mxu0 0.0
  %546 = vmatmul.mubr.f32.gmra.mrb[0].mxu0 %v212
  %v547 = vpop.f32.mrb[0].mxu0
  %v548 = vadd.f32 %v91, %v547
  %v549 = vpop.f32.mrb[0].mxu0
  %550 = vmatprep.mubr.f32.mxu0 0.0
  %551 = vmatmul.mubr.f32.gmra.mrb[0].mxu0 %v215
  %v552 = vpop.f32.mrb[0].mxu0
  %v553 = vadd.f32 %v91, %v552
  %v554 = vpop.f32.mrb[0].mxu0
  %555 = vmatprep.mubr.f32.mxu0 0.0
  %556 = vmatmul.mubr.f32.gmra.mrb[0].mxu0 %v218
  %v557 = vpop.f32.mrb[0].mxu0
  %v558 = vadd.f32 %v91, %v557
  %v559 = vpop.f32.mrb[0].mxu0
  %560 = vmatprep.mubr.f32.mxu0 0.0
  %561 = vmatmul.mubr.f32.gmra.mrb[0].mxu0 %v221
  %v562 = vpop.f32.mrb[0].mxu0
  %v563 = vadd.f32 %v91, %v562
  %v564 = vpop.f32.mrb[0].mxu0
  %565 = vmatprep.mubr.f32.mxu0 0.0
  %566 = vmatmul.mubr.f32.gmra.mrb[0].mxu0 %v224
  %v567 = vpop.f32.mrb[0].mxu0
  %v568 = vadd.f32 %v91, %v567
  %v569 = vpop.f32.mrb[0].mxu0
  %570 = vmatprep.mubr.f32.mxu0 0.0
  %571 = vmatmul.mubr.f32.gmra.mrb[0].mxu0 %v227
  %v572 = vpop.f32.mrb[0].mxu0
  %v573 = vadd.f32 %v91, %v572
  %v574 = vpop.f32.mrb[0].mxu0
  %575 = vmatprep.mubr.f32.mxu0 0.0
  %576 = vmatmul.mubr.f32.gmra.mrb[0].mxu0 %v230
  %v577 = vpop.f32.mrb[0].mxu0
  %v578 = vadd.f32 %v91, %v577
  %v579 = vpop.f32.mrb[0].mxu0
  %580 = vmatprep.mubr.f32.mxu0 0.0
  %581 = vmatmul.mubr.f32.gmra.mrb[0].mxu0 %v233
  %v582 = vpop.f32.mrb[0].mxu0
  %v583 = vadd.f32 %v91, %v582
  %v584 = vpop.f32.mrb[0].mxu0
  %585 = vmatprep.mubr.f32.mxu0 0.0
  %586 = vmatmul.mubr.f32.gmra.mrb[0].mxu0 %v236
  %v587 = vpop.f32.mrb[0].mxu0
  %v588 = vadd.f32 %v91, %v587
  %v589 = vpop.f32.mrb[0].mxu0
  %590 = vmatprep.mubr.f32.mxu0 0.0
  %591 = vmatmul.mubr.f32.gmra.mrb[0].mxu0 %v239
  %v592 = vpop.f32.mrb[0].mxu0
  %v593 = vadd.f32 %v91, %v592
  %v594 = vpop.f32.mrb[0].mxu0
  %595 = vmatprep.mubr.f32.mxu0 0.0
  %596 = vmatmul.mubr.f32.gmra.mrb[0].mxu0 %v242
  %v597 = vpop.f32.mrb[0].mxu0
  %v598 = vadd.f32 %v91, %v597
  %v599 = vpop.f32.mrb[0].mxu0
  %600 = vmatprep.mubr.f32.mxu0 0.0
  %601 = vmatmul.mubr.f32.gmra.mrb[0].mxu0 %v245
  %v602 = vpop.f32.mrb[0].mxu0
  %v603 = vadd.f32 %v91, %v602
  %v604 = vpop.f32.mrb[0].mxu0
  %605 = vmatprep.mubr.f32.mxu0 0.0
  %606 = vmatmul.mubr.f32.gmra.mrb[0].mxu0 %v248
  %v607 = vpop.f32.mrb[0].mxu0
  %v608 = vadd.f32 %v91, %v607
  %v609 = vpop.f32.mrb[0].mxu0
  %610 = vmatprep.mubr.f32.mxu0 0.0
  %611 = vmatmul.mubr.f32.gmra.mrb[0].mxu0 %v251
  %v612 = vpop.f32.mrb[0].mxu0
  %v613 = vadd.f32 %v91, %v612
  %v614 = vpop.f32.mrb[0].mxu0
  %615 = vmatprep.mubr.f32.mxu0 0.0
  %616 = vmatmul.mubr.f32.gmra.mrb[0].mxu0 %v254
  %v617 = vpop.f32.mrb[0].mxu0
  %v618 = vadd.f32 %v91, %v617
  %v619 = vpop.f32.mrb[0].mxu0
  %620 = vmatprep.mubr.f32.mxu0 0.0
  %621 = vmatmul.mubr.f32.gmra.mrb[0].mxu0 %v257
  %v622 = vpop.f32.mrb[0].mxu0
  %v623 = vadd.f32 %v91, %v622
  %v624 = vpop.f32.mrb[0].mxu0
  %625 = vmatprep.mubr.f32.mxu0 0.0
  %626 = vmatmul.mubr.f32.gmra.mrb[0].mxu0 %v260
  %v627 = vpop.f32.mrb[0].mxu0
  %v628 = vadd.f32 %v91, %v627
  %v629 = vpop.f32.mrb[0].mxu0
  %630 = vmatprep.mubr.f32.mxu0 0.0
  %631 = vmatmul.mubr.f32.gmra.mrb[0].mxu0 %v263
  %v632 = vpop.f32.mrb[0].mxu0
  %v633 = vadd.f32 %v91, %v632
  %v634 = vpop.f32.mrb[0].mxu0
  %635 = vmatprep.mubr.f32.mxu0 0.0
  %636 = vmatmul.mubr.f32.gmra.mrb[0].mxu0 %v266
  %v637 = vpop.f32.mrb[0].mxu0
  %v638 = vadd.f32 %v91, %v637
  %v639 = vpop.f32.mrb[0].mxu0
  %640 = vmatprep.mubr.f32.mxu0 0.0
  %641 = vmatmul.mubr.f32.gmra.mrb[0].mxu0 %v269
  %v642 = vpop.f32.mrb[0].mxu0
  %v643 = vadd.f32 %v91, %v642
  %v644 = vpop.f32.mrb[0].mxu0
  %645 = vmatprep.mubr.f32.mxu0 0.0
  %646 = vmatmul.mubr.f32.gmra.mrb[0].mxu0 %v272
  %v647 = vpop.f32.mrb[0].mxu0
  %v648 = vadd.f32 %v91, %v647
  %v649 = vpop.f32.mrb[0].mxu0
  %650 = vmatprep.mubr.f32.mxu0 0.0
  %651 = vmatmul.mubr.f32.gmra.mrb[0].mxu0 %v275
  %v652 = vpop.f32.mrb[0].mxu0
  %v653 = vadd.f32 %v91, %v652
  %v654 = vpop.f32.mrb[0].mxu0
  %655 = vmatprep.mubr.f32.mxu0 0.0
  %656 = vmatmul.mubr.f32.gmra.mrb[0].mxu0 %v278
  %v657 = vpop.f32.mrb[0].mxu0
  %v658 = vadd.f32 %v91, %v657
  %v659 = vpop.f32.mrb[0].mxu0
  %660 = vmatprep.mubr.f32.mxu0 0.0
  %661 = vmatmul.mubr.f32.gmra.mrb[0].mxu0 %v281
  %v662 = vpop.f32.mrb[0].mxu0
  %v663 = vadd.f32 %v91, %v662
  %v664 = vpop.f32.mrb[0].mxu0
  %665 = vmatprep.mubr.f32.mxu0 0.0
  %666 = vmatmul.mubr.f32.gmra.mrb[0].mxu0 %v284
  %v667 = vpop.f32.mrb[0].mxu0
  %v668 = vadd.f32 %v91, %v667
  %v669 = vpop.f32.mrb[0].mxu0
  %670 = vdwg.mxu0
  %v671 = vmax.f32 %v353, 0.0
  %v672 = vmax.f32 %v358, 0.0
  %v673 = vmax.f32 %v363, 0.0
  %v674 = vmax.f32 %v368, 0.0
  %v675 = vmax.f32 %v373, 0.0
  %v676 = vmax.f32 %v378, 0.0
  %v677 = vmax.f32 %v383, 0.0
  %v678 = vmax.f32 %v388, 0.0
  %v679 = vmax.f32 %v393, 0.0
  %v680 = vmax.f32 %v398, 0.0
  %v681 = vmax.f32 %v403, 0.0
  %v682 = vmax.f32 %v408, 0.0
  %v683 = vmax.f32 %v413, 0.0
  %v684 = vmax.f32 %v418, 0.0
  %v685 = vmax.f32 %v423, 0.0
  %v686 = vmax.f32 %v428, 0.0
  %v687 = vmax.f32 %v433, 0.0
  %v688 = vmax.f32 %v438, 0.0
  %v689 = vmax.f32 %v443, 0.0
  %v690 = vmax.f32 %v448, 0.0
  %v691 = vmax.f32 %v453, 0.0
  %v692 = vmax.f32 %v458, 0.0
  %v693 = vmax.f32 %v463, 0.0
  %v694 = vmax.f32 %v468, 0.0
  %v695 = vmax.f32 %v473, 0.0
  %v696 = vmax.f32 %v478, 0.0
  %v697 = vmax.f32 %v483, 0.0
  %v698 = vmax.f32 %v488, 0.0
  %v699 = vmax.f32 %v493, 0.0
  %v700 = vmax.f32 %v498, 0.0
  %v701 = vmax.f32 %v503, 0.0
  %v702 = vmax.f32 %v508, 0.0
  %v703 = vmax.f32 %v513, 0.0
  %v704 = vmax.f32 %v518, 0.0
  %v705 = vmax.f32 %v523, 0.0
  %v706 = vmax.f32 %v528, 0.0
  %v707 = vmax.f32 %v533, 0.0
  %v708 = vmax.f32 %v538, 0.0
  %v709 = vmax.f32 %v543, 0.0
  %v710 = vmax.f32 %v548, 0.0
  %v711 = vmax.f32 %v553, 0.0
  %v712 = vmax.f32 %v558, 0.0
  %v713 = vmax.f32 %v563, 0.0
  %v714 = vmax.f32 %v568, 0.0
  %v715 = vmax.f32 %v573, 0.0
  %v716 = vmax.f32 %v578, 0.0
  %v717 = vmax.f32 %v583, 0.0
  %v718 = vmax.f32 %v588, 0.0
  %v719 = vmax.f32 %v593, 0.0
  %v720 = vmax.f32 %v598, 0.0
  %v721 = vmax.f32 %v603, 0.0
  %v722 = vmax.f32 %v608, 0.0
  %v723 = vmax.f32 %v613, 0.0
  %v724 = vmax.f32 %v618, 0.0
  %v725 = vmax.f32 %v623, 0.0
  %v726 = vmax.f32 %v628, 0.0
  %v727 = vmax.f32 %v633, 0.0
  %v728 = vmax.f32 %v638, 0.0
  %v729 = vmax.f32 %v643, 0.0
  %v730 = vmax.f32 %v648, 0.0
  %v731 = vmax.f32 %v653, 0.0
  %v732 = vmax.f32 %v658, 0.0
  %v733 = vmax.f32 %v663, 0.0
  %v734 = vmax.f32 %v668, 0.0
  %v735 = vld [vmem:[%s3] sm:$0xff]
  %v736 = vld [vmem:[%s3 + $0x8] sm:$0xff]
  %v737 = vld [vmem:[%s3 + $0x10] sm:$0xff]
  %v738 = vld [vmem:[%s3 + $0x18] sm:$0xff]
  %v739 = vld [vmem:[%s3 + $0x20] sm:$0xff]
  %v740 = vld [vmem:[%s3 + $0x28] sm:$0xff]
  %v741 = vld [vmem:[%s3 + $0x30] sm:$0xff]
  %v742 = vld [vmem:[%s3 + $0x38] sm:$0xff]
  %v743 = vld [vmem:[%s4] sm:$0x1]
  %v745 = vlaneseq
  %v746 = vshrl.u32 %v745, 7
  %v747 = vsub.s32 0, %v746
  %v748 = vrot.slane %v743, %v747
  %vm750 = vcmask 523264
  %v752 = vsel %vm750, %v671, 0
  %v755 = vsel %vm750, %v672, 0
  %v758 = vsel %vm750, %v673, 0
  %v761 = vsel %vm750, %v674, 0
  %v764 = vsel %vm750, %v675, 0
  %v767 = vsel %vm750, %v676, 0
  %v770 = vsel %vm750, %v677, 0
  %v773 = vsel %vm750, %v678, 0
  %v776 = vsel %vm750, %v679, 0
  %v779 = vsel %vm750, %v680, 0
  %v782 = vsel %vm750, %v681, 0
  %v785 = vsel %vm750, %v682, 0
  %v788 = vsel %vm750, %v683, 0
  %v791 = vsel %vm750, %v684, 0
  %v794 = vsel %vm750, %v685, 0
  %v797 = vsel %vm750, %v686, 0
  %v800 = vsel %vm750, %v687, 0
  %v803 = vsel %vm750, %v688, 0
  %v806 = vsel %vm750, %v689, 0
  %v809 = vsel %vm750, %v690, 0
  %v812 = vsel %vm750, %v691, 0
  %v815 = vsel %vm750, %v692, 0
  %v818 = vsel %vm750, %v693, 0
  %v821 = vsel %vm750, %v694, 0
  %v824 = vsel %vm750, %v695, 0
  %v827 = vsel %vm750, %v696, 0
  %v830 = vsel %vm750, %v697, 0
  %v833 = vsel %vm750, %v698, 0
  %v836 = vsel %vm750, %v699, 0
  %v839 = vsel %vm750, %v700, 0
  %v842 = vsel %vm750, %v701, 0
  %v845 = vsel %vm750, %v702, 0
  %v848 = vsel %vm750, %v703, 0
  %v851 = vsel %vm750, %v704, 0
  %v854 = vsel %vm750, %v705, 0
  %v857 = vsel %vm750, %v706, 0
  %v860 = vsel %vm750, %v707, 0
  %v863 = vsel %vm750, %v708, 0
  %v866 = vsel %vm750, %v709, 0
  %v869 = vsel %vm750, %v710, 0
  %v872 = vsel %vm750, %v711, 0
  %v875 = vsel %vm750, %v712, 0
  %v878 = vsel %vm750, %v713, 0
  %v881 = vsel %vm750, %v714, 0
  %v884 = vsel %vm750, %v715, 0
  %v887 = vsel %vm750, %v716, 0
  %v890 = vsel %vm750, %v717, 0
  %v893 = vsel %vm750, %v718, 0
  %v896 = vsel %vm750, %v719, 0
  %v899 = vsel %vm750, %v720, 0
  %v902 = vsel %vm750, %v721, 0
  %v905 = vsel %vm750, %v722, 0
  %v908 = vsel %vm750, %v723, 0
  %v911 = vsel %vm750, %v724, 0
  %v914 = vsel %vm750, %v725, 0
  %v917 = vsel %vm750, %v726, 0
  %v920 = vsel %vm750, %v727, 0
  %v923 = vsel %vm750, %v728, 0
  %v926 = vsel %vm750, %v729, 0
  %v929 = vsel %vm750, %v730, 0
  %v932 = vsel %vm750, %v731, 0
  %v935 = vsel %vm750, %v732, 0
  %v938 = vsel %vm750, %v733, 0
  %v941 = vsel %vm750, %v734, 0
  %943 = vmatprep.subr.mxu0 0.0
  %944 = vmatpush1.msra.mxu0 %v735
  %945 = vmatprep.subr.mxu0 0.0
  %946 = vmatpush1.msra.mxu0 %v736
  %947 = vmatprep.subr.mxu0 0.0
  %948 = vmatpush1.msra.mxu0 %v737
  %949 = vmatprep.subr.mxu0 0.0
  %950 = vmatpush1.msra.mxu0 %v738
  %951 = vmatprep.subr.mxu0 0.0
  %952 = vmatpush1.msra.mxu0 %v739
  %953 = vmatprep.subr.mxu0 0.0
  %954 = vmatpush1.msra.mxu0 %v740
  %955 = vmatprep.subr.mxu0 0.0
  %956 = vmatpush1.msra.mxu0 %v741
  %957 = vmatprep.subr.mxu0 0.0
  %958 = vmatpush1.msra.mxu0 %v742
  %959 = vmatprep.subr.mxu0 0.0
  %960 = vmatpush1.msra.mxu0 0.0
  %961 = vmatprep.subr.mxu0 0.0
  %962 = vmatpush1.msra.mxu0 0.0
  %963 = vmatprep.subr.mxu0 0.0
  %964 = vmatpush1.msra.mxu0 0.0
  %965 = vmatprep.subr.mxu0 0.0
  %966 = vmatpush1.msra.mxu0 0.0
  %967 = vmatprep.subr.mxu0 0.0
  %968 = vmatpush1.msra.mxu0 0.0
  %969 = vmatprep.subr.mxu0 0.0
  %970 = vmatpush1.msra.mxu0 0.0
  %971 = vmatprep.subr.mxu0 0.0
  %972 = vmatpush1.msra.mxu0 0.0
  %973 = vmatprep.subr.mxu0 0.0
  %974 = vmatpush1.msra.mxu0 0.0
  %975 = vmatprep.subr.mxu0 0.0
  %976 = vmatpush1.msra.mxu0 0.0
  %977 = vmatprep.subr.mxu0 0.0
  %978 = vmatpush1.msra.mxu0 0.0
  %979 = vmatprep.subr.mxu0 0.0
  %980 = vmatpush1.msra.mxu0 0.0
  %981 = vmatprep.subr.mxu0 0.0
  %982 = vmatpush1.msra.mxu0 0.0
  %983 = vmatprep.subr.mxu0 0.0
  %984 = vmatpush1.msra.mxu0 0.0
  %985 = vmatprep.subr.mxu0 0.0
  %986 = vmatpush1.msra.mxu0 0.0
  %987 = vmatprep.subr.mxu0 0.0
  %988 = vmatpush1.msra.mxu0 0.0
  %989 = vmatprep.subr.mxu0 0.0
  %990 = vmatpush1.msra.mxu0 0.0
  %991 = vmatprep.subr.mxu0 0.0
  %992 = vmatpush1.msra.mxu0 0.0
  %993 = vmatprep.subr.mxu0 0.0
  %994 = vmatpush1.msra.mxu0 0.0
  %995 = vmatprep.subr.mxu0 0.0
  %996 = vmatpush1.msra.mxu0 0.0
  %997 = vmatprep.subr.mxu0 0.0
  %998 = vmatpush1.msra.mxu0 0.0
  %999 = vmatprep.subr.mxu0 0.0
  %1000 = vmatpush1.msra.mxu0 0.0
  %1001 = vmatprep.subr.mxu0 0.0
  %1002 = vmatpush1.msra.mxu0 0.0
  %1003 = vmatprep.subr.mxu0 0.0
  %1004 = vmatpush1.msra.mxu0 0.0
  %1005 = vmatprep.subr.mxu0 0.0
  %1006 = vmatpush1.msra.mxu0 0.0
  %1007 = vmatprep.mubr.f32.mxu0 0.0
  %1008 = vmatmul.mubr.f32.gmra.mrb[0].mxu0 %v752
  %v1009 = vpop.f32.mrb[0].mxu0
  %v1010 = vadd.f32 %v748, %v1009
  %v1011 = vpop.f32.mrb[0].mxu0
  %1012 = vmatprep.mubr.f32.mxu0 0.0
  %1013 = vmatmul.mubr.f32.gmra.mrb[0].mxu0 %v755
  %v1014 = vpop.f32.mrb[0].mxu0
  %v1015 = vadd.f32 %v748, %v1014
  %v1016 = vpop.f32.mrb[0].mxu0
  %1017 = vmatprep.mubr.f32.mxu0 0.0
  %1018 = vmatmul.mubr.f32.gmra.mrb[0].mxu0 %v758
  %v1019 = vpop.f32.mrb[0].mxu0
  %v1020 = vadd.f32 %v748, %v1019
  %v1021 = vpop.f32.mrb[0].mxu0
  %1022 = vmatprep.mubr.f32.mxu0 0.0
  %1023 = vmatmul.mubr.f32.gmra.mrb[0].mxu0 %v761
  %v1024 = vpop.f32.mrb[0].mxu0
  %v1025 = vadd.f32 %v748, %v1024
  %v1026 = vpop.f32.mrb[0].mxu0
  %1027 = vmatprep.mubr.f32.mxu0 0.0
  %1028 = vmatmul.mubr.f32.gmra.mrb[0].mxu0 %v764
  %v1029 = vpop.f32.mrb[0].mxu0
  %v1030 = vadd.f32 %v748, %v1029
  %v1031 = vpop.f32.mrb[0].mxu0
  %1032 = vmatprep.mubr.f32.mxu0 0.0
  %1033 = vmatmul.mubr.f32.gmra.mrb[0].mxu0 %v767
  %v1034 = vpop.f32.mrb[0].mxu0
  %v1035 = vadd.f32 %v748, %v1034
  %v1036 = vpop.f32.mrb[0].mxu0
  %1037 = vmatprep.mubr.f32.mxu0 0.0
  %1038 = vmatmul.mubr.f32.gmra.mrb[0].mxu0 %v770
  %v1039 = vpop.f32.mrb[0].mxu0
  %v1040 = vadd.f32 %v748, %v1039
  %v1041 = vpop.f32.mrb[0].mxu0
  %1042 = vmatprep.mubr.f32.mxu0 0.0
  %1043 = vmatmul.mubr.f32.gmra.mrb[0].mxu0 %v773
  %v1044 = vpop.f32.mrb[0].mxu0
  %v1045 = vadd.f32 %v748, %v1044
  %v1046 = vpop.f32.mrb[0].mxu0
  %1047 = vmatprep.mubr.f32.mxu0 0.0
  %1048 = vmatmul.mubr.f32.gmra.mrb[0].mxu0 %v776
  %v1049 = vpop.f32.mrb[0].mxu0
  %v1050 = vadd.f32 %v748, %v1049
  %v1051 = vpop.f32.mrb[0].mxu0
  %1052 = vmatprep.mubr.f32.mxu0 0.0
  %1053 = vmatmul.mubr.f32.gmra.mrb[0].mxu0 %v779
  %v1054 = vpop.f32.mrb[0].mxu0
  %v1055 = vadd.f32 %v748, %v1054
  %v1056 = vpop.f32.mrb[0].mxu0
  %1057 = vmatprep.mubr.f32.mxu0 0.0
  %1058 = vmatmul.mubr.f32.gmra.mrb[0].mxu0 %v782
  %v1059 = vpop.f32.mrb[0].mxu0
  %v1060 = vadd.f32 %v748, %v1059
  %v1061 = vpop.f32.mrb[0].mxu0
  %1062 = vmatprep.mubr.f32.mxu0 0.0
  %1063 = vmatmul.mubr.f32.gmra.mrb[0].mxu0 %v785
  %v1064 = vpop.f32.mrb[0].mxu0
  %v1065 = vadd.f32 %v748, %v1064
  %v1066 = vpop.f32.mrb[0].mxu0
  %1067 = vmatprep.mubr.f32.mxu0 0.0
  %1068 = vmatmul.mubr.f32.gmra.mrb[0].mxu0 %v788
  %v1069 = vpop.f32.mrb[0].mxu0
  %v1070 = vadd.f32 %v748, %v1069
  %v1071 = vpop.f32.mrb[0].mxu0
  %1072 = vmatprep.mubr.f32.mxu0 0.0
  %1073 = vmatmul.mubr.f32.gmra.mrb[0].mxu0 %v791
  %v1074 = vpop.f32.mrb[0].mxu0
  %v1075 = vadd.f32 %v748, %v1074
  %v1076 = vpop.f32.mrb[0].mxu0
  %1077 = vmatprep.mubr.f32.mxu0 0.0
  %1078 = vmatmul.mubr.f32.gmra.mrb[0].mxu0 %v794
  %v1079 = vpop.f32.mrb[0].mxu0
  %v1080 = vadd.f32 %v748, %v1079
  %v1081 = vpop.f32.mrb[0].mxu0
  %1082 = vmatprep.mubr.f32.mxu0 0.0
  %1083 = vmatmul.mubr.f32.gmra.mrb[0].mxu0 %v797
  %v1084 = vpop.f32.mrb[0].mxu0
  %v1085 = vadd.f32 %v748, %v1084
  %v1086 = vpop.f32.mrb[0].mxu0
  %1087 = vmatprep.mubr.f32.mxu0 0.0
  %1088 = vmatmul.mubr.f32.gmra.mrb[0].mxu0 %v800
  %v1089 = vpop.f32.mrb[0].mxu0
  %v1090 = vadd.f32 %v748, %v1089
  %v1091 = vpop.f32.mrb[0].mxu0
  %1092 = vmatprep.mubr.f32.mxu0 0.0
  %1093 = vmatmul.mubr.f32.gmra.mrb[0].mxu0 %v803
  %v1094 = vpop.f32.mrb[0].mxu0
  %v1095 = vadd.f32 %v748, %v1094
  %v1096 = vpop.f32.mrb[0].mxu0
  %1097 = vmatprep.mubr.f32.mxu0 0.0
  %1098 = vmatmul.mubr.f32.gmra.mrb[0].mxu0 %v806
  %v1099 = vpop.f32.mrb[0].mxu0
  %v1100 = vadd.f32 %v748, %v1099
  %v1101 = vpop.f32.mrb[0].mxu0
  %1102 = vmatprep.mubr.f32.mxu0 0.0
  %1103 = vmatmul.mubr.f32.gmra.mrb[0].mxu0 %v809
  %v1104 = vpop.f32.mrb[0].mxu0
  %v1105 = vadd.f32 %v748, %v1104
  %v1106 = vpop.f32.mrb[0].mxu0
  %1107 = vmatprep.mubr.f32.mxu0 0.0
  %1108 = vmatmul.mubr.f32.gmra.mrb[0].mxu0 %v812
  %v1109 = vpop.f32.mrb[0].mxu0
  %v1110 = vadd.f32 %v748, %v1109
  %v1111 = vpop.f32.mrb[0].mxu0
  %1112 = vmatprep.mubr.f32.mxu0 0.0
  %1113 = vmatmul.mubr.f32.gmra.mrb[0].mxu0 %v815
  %v1114 = vpop.f32.mrb[0].mxu0
  %v1115 = vadd.f32 %v748, %v1114
  %v1116 = vpop.f32.mrb[0].mxu0
  %1117 = vmatprep.mubr.f32.mxu0 0.0
  %1118 = vmatmul.mubr.f32.gmra.mrb[0].mxu0 %v818
  %v1119 = vpop.f32.mrb[0].mxu0
  %v1120 = vadd.f32 %v748, %v1119
  %v1121 = vpop.f32.mrb[0].mxu0
  %1122 = vmatprep.mubr.f32.mxu0 0.0
  %1123 = vmatmul.mubr.f32.gmra.mrb[0].mxu0 %v821
  %v1124 = vpop.f32.mrb[0].mxu0
  %v1125 = vadd.f32 %v748, %v1124
  %v1126 = vpop.f32.mrb[0].mxu0
  %1127 = vmatprep.mubr.f32.mxu0 0.0
  %1128 = vmatmul.mubr.f32.gmra.mrb[0].mxu0 %v824
  %v1129 = vpop.f32.mrb[0].mxu0
  %v1130 = vadd.f32 %v748, %v1129
  %v1131 = vpop.f32.mrb[0].mxu0
  %1132 = vmatprep.mubr.f32.mxu0 0.0
  %1133 = vmatmul.mubr.f32.gmra.mrb[0].mxu0 %v827
  %v1134 = vpop.f32.mrb[0].mxu0
  %v1135 = vadd.f32 %v748, %v1134
  %v1136 = vpop.f32.mrb[0].mxu0
  %1137 = vmatprep.mubr.f32.mxu0 0.0
  %1138 = vmatmul.mubr.f32.gmra.mrb[0].mxu0 %v830
  %v1139 = vpop.f32.mrb[0].mxu0
  %v1140 = vadd.f32 %v748, %v1139
  %v1141 = vpop.f32.mrb[0].mxu0
  %1142 = vmatprep.mubr.f32.mxu0 0.0
  %1143 = vmatmul.mubr.f32.gmra.mrb[0].mxu0 %v833
  %v1144 = vpop.f32.mrb[0].mxu0
  %v1145 = vadd.f32 %v748, %v1144
  %v1146 = vpop.f32.mrb[0].mxu0
  %1147 = vmatprep.mubr.f32.mxu0 0.0
  %1148 = vmatmul.mubr.f32.gmra.mrb[0].mxu0 %v836
  %v1149 = vpop.f32.mrb[0].mxu0
  %v1150 = vadd.f32 %v748, %v1149
  %v1151 = vpop.f32.mrb[0].mxu0
  %1152 = vmatprep.mubr.f32.mxu0 0.0
  %1153 = vmatmul.mubr.f32.gmra.mrb[0].mxu0 %v839
  %v1154 = vpop.f32.mrb[0].mxu0
  %v1155 = vadd.f32 %v748, %v1154
  %v1156 = vpop.f32.mrb[0].mxu0
  %1157 = vmatprep.mubr.f32.mxu0 0.0
  %1158 = vmatmul.mubr.f32.gmra.mrb[0].mxu0 %v842
  %v1159 = vpop.f32.mrb[0].mxu0
  %v1160 = vadd.f32 %v748, %v1159
  %v1161 = vpop.f32.mrb[0].mxu0
  %1162 = vmatprep.mubr.f32.mxu0 0.0
  %1163 = vmatmul.mubr.f32.gmra.mrb[0].mxu0 %v845
  %v1164 = vpop.f32.mrb[0].mxu0
  %v1165 = vadd.f32 %v748, %v1164
  %v1166 = vpop.f32.mrb[0].mxu0
  %1167 = vmatprep.mubr.f32.mxu0 0.0
  %1168 = vmatmul.mubr.f32.gmra.mrb[0].mxu0 %v848
  %v1169 = vpop.f32.mrb[0].mxu0
  %v1170 = vadd.f32 %v748, %v1169
  %v1171 = vpop.f32.mrb[0].mxu0
  %1172 = vmatprep.mubr.f32.mxu0 0.0
  %1173 = vmatmul.mubr.f32.gmra.mrb[0].mxu0 %v851
  %v1174 = vpop.f32.mrb[0].mxu0
  %v1175 = vadd.f32 %v748, %v1174
  %v1176 = vpop.f32.mrb[0].mxu0
  %1177 = vmatprep.mubr.f32.mxu0 0.0
  %1178 = vmatmul.mubr.f32.gmra.mrb[0].mxu0 %v854
  %v1179 = vpop.f32.mrb[0].mxu0
  %v1180 = vadd.f32 %v748, %v1179
  %v1181 = vpop.f32.mrb[0].mxu0
  %1182 = vmatprep.mubr.f32.mxu0 0.0
  %1183 = vmatmul.mubr.f32.gmra.mrb[0].mxu0 %v857
  %v1184 = vpop.f32.mrb[0].mxu0
  %v1185 = vadd.f32 %v748, %v1184
  %v1186 = vpop.f32.mrb[0].mxu0
  %1187 = vmatprep.mubr.f32.mxu0 0.0
  %1188 = vmatmul.mubr.f32.gmra.mrb[0].mxu0 %v860
  %v1189 = vpop.f32.mrb[0].mxu0
  %v1190 = vadd.f32 %v748, %v1189
  %v1191 = vpop.f32.mrb[0].mxu0
  %1192 = vmatprep.mubr.f32.mxu0 0.0
  %1193 = vmatmul.mubr.f32.gmra.mrb[0].mxu0 %v863
  %v1194 = vpop.f32.mrb[0].mxu0
  %v1195 = vadd.f32 %v748, %v1194
  %v1196 = vpop.f32.mrb[0].mxu0
  %1197 = vmatprep.mubr.f32.mxu0 0.0
  %1198 = vmatmul.mubr.f32.gmra.mrb[0].mxu0 %v866
  %v1199 = vpop.f32.mrb[0].mxu0
  %v1200 = vadd.f32 %v748, %v1199
  %v1201 = vpop.f32.mrb[0].mxu0
  %1202 = vmatprep.mubr.f32.mxu0 0.0
  %1203 = vmatmul.mubr.f32.gmra.mrb[0].mxu0 %v869
  %v1204 = vpop.f32.mrb[0].mxu0
  %v1205 = vadd.f32 %v748, %v1204
  %v1206 = vpop.f32.mrb[0].mxu0
  %1207 = vmatprep.mubr.f32.mxu0 0.0
  %1208 = vmatmul.mubr.f32.gmra.mrb[0].mxu0 %v872
  %v1209 = vpop.f32.mrb[0].mxu0
  %v1210 = vadd.f32 %v748, %v1209
  %v1211 = vpop.f32.mrb[0].mxu0
  %1212 = vmatprep.mubr.f32.mxu0 0.0
  %1213 = vmatmul.mubr.f32.gmra.mrb[0].mxu0 %v875
  %v1214 = vpop.f32.mrb[0].mxu0
  %v1215 = vadd.f32 %v748, %v1214
  %v1216 = vpop.f32.mrb[0].mxu0
  %1217 = vmatprep.mubr.f32.mxu0 0.0
  %1218 = vmatmul.mubr.f32.gmra.mrb[0].mxu0 %v878
  %v1219 = vpop.f32.mrb[0].mxu0
  %v1220 = vadd.f32 %v748, %v1219
  %v1221 = vpop.f32.mrb[0].mxu0
  %1222 = vmatprep.mubr.f32.mxu0 0.0
  %1223 = vmatmul.mubr.f32.gmra.mrb[0].mxu0 %v881
  %v1224 = vpop.f32.mrb[0].mxu0
  %v1225 = vadd.f32 %v748, %v1224
  %v1226 = vpop.f32.mrb[0].mxu0
  %1227 = vmatprep.mubr.f32.mxu0 0.0
  %1228 = vmatmul.mubr.f32.gmra.mrb[0].mxu0 %v884
  %v1229 = vpop.f32.mrb[0].mxu0
  %v1230 = vadd.f32 %v748, %v1229
  %v1231 = vpop.f32.mrb[0].mxu0
  %1232 = vmatprep.mubr.f32.mxu0 0.0
  %1233 = vmatmul.mubr.f32.gmra.mrb[0].mxu0 %v887
  %v1234 = vpop.f32.mrb[0].mxu0
  %v1235 = vadd.f32 %v748, %v1234
  %v1236 = vpop.f32.mrb[0].mxu0
  %1237 = vmatprep.mubr.f32.mxu0 0.0
  %1238 = vmatmul.mubr.f32.gmra.mrb[0].mxu0 %v890
  %v1239 = vpop.f32.mrb[0].mxu0
  %v1240 = vadd.f32 %v748, %v1239
  %v1241 = vpop.f32.mrb[0].mxu0
  %1242 = vmatprep.mubr.f32.mxu0 0.0
  %1243 = vmatmul.mubr.f32.gmra.mrb[0].mxu0 %v893
  %v1244 = vpop.f32.mrb[0].mxu0
  %v1245 = vadd.f32 %v748, %v1244
  %v1246 = vpop.f32.mrb[0].mxu0
  %1247 = vmatprep.mubr.f32.mxu0 0.0
  %1248 = vmatmul.mubr.f32.gmra.mrb[0].mxu0 %v896
  %v1249 = vpop.f32.mrb[0].mxu0
  %v1250 = vadd.f32 %v748, %v1249
  %v1251 = vpop.f32.mrb[0].mxu0
  %1252 = vmatprep.mubr.f32.mxu0 0.0
  %1253 = vmatmul.mubr.f32.gmra.mrb[0].mxu0 %v899
  %v1254 = vpop.f32.mrb[0].mxu0
  %v1255 = vadd.f32 %v748, %v1254
  %v1256 = vpop.f32.mrb[0].mxu0
  %1257 = vmatprep.mubr.f32.mxu0 0.0
  %1258 = vmatmul.mubr.f32.gmra.mrb[0].mxu0 %v902
  %v1259 = vpop.f32.mrb[0].mxu0
  %v1260 = vadd.f32 %v748, %v1259
  %v1261 = vpop.f32.mrb[0].mxu0
  %1262 = vmatprep.mubr.f32.mxu0 0.0
  %1263 = vmatmul.mubr.f32.gmra.mrb[0].mxu0 %v905
  %v1264 = vpop.f32.mrb[0].mxu0
  %v1265 = vadd.f32 %v748, %v1264
  %v1266 = vpop.f32.mrb[0].mxu0
  %1267 = vmatprep.mubr.f32.mxu0 0.0
  %1268 = vmatmul.mubr.f32.gmra.mrb[0].mxu0 %v908
  %v1269 = vpop.f32.mrb[0].mxu0
  %v1270 = vadd.f32 %v748, %v1269
  %v1271 = vpop.f32.mrb[0].mxu0
  %1272 = vmatprep.mubr.f32.mxu0 0.0
  %1273 = vmatmul.mubr.f32.gmra.mrb[0].mxu0 %v911
  %v1274 = vpop.f32.mrb[0].mxu0
  %v1275 = vadd.f32 %v748, %v1274
  %v1276 = vpop.f32.mrb[0].mxu0
  %1277 = vmatprep.mubr.f32.mxu0 0.0
  %1278 = vmatmul.mubr.f32.gmra.mrb[0].mxu0 %v914
  %v1279 = vpop.f32.mrb[0].mxu0
  %v1280 = vadd.f32 %v748, %v1279
  %v1281 = vpop.f32.mrb[0].mxu0
  %1282 = vmatprep.mubr.f32.mxu0 0.0
  %1283 = vmatmul.mubr.f32.gmra.mrb[0].mxu0 %v917
  %v1284 = vpop.f32.mrb[0].mxu0
  %v1285 = vadd.f32 %v748, %v1284
  %v1286 = vpop.f32.mrb[0].mxu0
  %1287 = vmatprep.mubr.f32.mxu0 0.0
  %1288 = vmatmul.mubr.f32.gmra.mrb[0].mxu0 %v920
  %v1289 = vpop.f32.mrb[0].mxu0
  %v1290 = vadd.f32 %v748, %v1289
  %v1291 = vpop.f32.mrb[0].mxu0
  %1292 = vmatprep.mubr.f32.mxu0 0.0
  %1293 = vmatmul.mubr.f32.gmra.mrb[0].mxu0 %v923
  %v1294 = vpop.f32.mrb[0].mxu0
  %v1295 = vadd.f32 %v748, %v1294
  %v1296 = vpop.f32.mrb[0].mxu0
  %1297 = vmatprep.mubr.f32.mxu0 0.0
  %1298 = vmatmul.mubr.f32.gmra.mrb[0].mxu0 %v926
  %v1299 = vpop.f32.mrb[0].mxu0
  %v1300 = vadd.f32 %v748, %v1299
  %v1301 = vpop.f32.mrb[0].mxu0
  %1302 = vmatprep.mubr.f32.mxu0 0.0
  %1303 = vmatmul.mubr.f32.gmra.mrb[0].mxu0 %v929
  %v1304 = vpop.f32.mrb[0].mxu0
  %v1305 = vadd.f32 %v748, %v1304
  %v1306 = vpop.f32.mrb[0].mxu0
  %1307 = vmatprep.mubr.f32.mxu0 0.0
  %1308 = vmatmul.mubr.f32.gmra.mrb[0].mxu0 %v932
  %v1309 = vpop.f32.mrb[0].mxu0
  %v1310 = vadd.f32 %v748, %v1309
  %v1311 = vpop.f32.mrb[0].mxu0
  %1312 = vmatprep.mubr.f32.mxu0 0.0
  %1313 = vmatmul.mubr.f32.gmra.mrb[0].mxu0 %v935
  %v1314 = vpop.f32.mrb[0].mxu0
  %v1315 = vadd.f32 %v748, %v1314
  %v1316 = vpop.f32.mrb[0].mxu0
  %1317 = vmatprep.mubr.f32.mxu0 0.0
  %1318 = vmatmul.mubr.f32.gmra.mrb[0].mxu0 %v938
  %v1319 = vpop.f32.mrb[0].mxu0
  %v1320 = vadd.f32 %v748, %v1319
  %v1321 = vpop.f32.mrb[0].mxu0
  %1322 = vmatprep.mubr.f32.mxu0 0.0
  %1323 = vmatmul.mubr.f32.gmra.mrb[0].mxu0 %v941
  %v1324 = vpop.f32.mrb[0].mxu0
  %v1325 = vadd.f32 %v748, %v1324
  %v1326 = vpop.f32.mrb[0].mxu0
  %1327 = vdwg.mxu0
  %vm1328 = vcmask 392192
  %1329 = vst.msk [vmem:[%s5] sm:$0xff] %vm1328, %v1010
  %1330 = vst.msk [vmem:[%s5 + $0x8] sm:$0xff] %vm1328, %v1015
  %1331 = vst.msk [vmem:[%s5 + $0x10] sm:$0xff] %vm1328, %v1020
  %1332 = vst.msk [vmem:[%s5 + $0x18] sm:$0xff] %vm1328, %v1025
  %1333 = vst.msk [vmem:[%s5 + $0x20] sm:$0xff] %vm1328, %v1030
  %1334 = vst.msk [vmem:[%s5 + $0x28] sm:$0xff] %vm1328, %v1035
  %1335 = vst.msk [vmem:[%s5 + $0x30] sm:$0xff] %vm1328, %v1040
  %1336 = vst.msk [vmem:[%s5 + $0x38] sm:$0xff] %vm1328, %v1045
  %1337 = vst.msk [vmem:[%s5 + $0x40] sm:$0xff] %vm1328, %v1050
  %1338 = vst.msk [vmem:[%s5 + $0x48] sm:$0xff] %vm1328, %v1055
  %1339 = vst.msk [vmem:[%s5 + $0x50] sm:$0xff] %vm1328, %v1060
  %1340 = vst.msk [vmem:[%s5 + $0x58] sm:$0xff] %vm1328, %v1065
  %1341 = vst.msk [vmem:[%s5 + $0x60] sm:$0xff] %vm1328, %v1070
  %1342 = vst.msk [vmem:[%s5 + $0x68] sm:$0xff] %vm1328, %v1075
  %1343 = vst.msk [vmem:[%s5 + $0x70] sm:$0xff] %vm1328, %v1080
  %1344 = vst.msk [vmem:[%s5 + $0x78] sm:$0xff] %vm1328, %v1085
  %1345 = vst.msk [vmem:[%s5 + $0x80] sm:$0xff] %vm1328, %v1090
  %1346 = vst.msk [vmem:[%s5 + $0x88] sm:$0xff] %vm1328, %v1095
  %1347 = vst.msk [vmem:[%s5 + $0x90] sm:$0xff] %vm1328, %v1100
  %1348 = vst.msk [vmem:[%s5 + $0x98] sm:$0xff] %vm1328, %v1105
  %1349 = vst.msk [vmem:[%s5 + $0xa0] sm:$0xff] %vm1328, %v1110
  %1350 = vst.msk [vmem:[%s5 + $0xa8] sm:$0xff] %vm1328, %v1115
  %1351 = vst.msk [vmem:[%s5 + $0xb0] sm:$0xff] %vm1328, %v1120
  %1352 = vst.msk [vmem:[%s5 + $0xb8] sm:$0xff] %vm1328, %v1125
  %1353 = vst.msk [vmem:[%s5 + $0xc0] sm:$0xff] %vm1328, %v1130
  %1354 = vst.msk [vmem:[%s5 + $0xc8] sm:$0xff] %vm1328, %v1135
  %1355 = vst.msk [vmem:[%s5 + $0xd0] sm:$0xff] %vm1328, %v1140
  %1356 = vst.msk [vmem:[%s5 + $0xd8] sm:$0xff] %vm1328, %v1145
  %1357 = vst.msk [vmem:[%s5 + $0xe0] sm:$0xff] %vm1328, %v1150
  %1358 = vst.msk [vmem:[%s5 + $0xe8] sm:$0xff] %vm1328, %v1155
  %1359 = vst.msk [vmem:[%s5 + $0xf0] sm:$0xff] %vm1328, %v1160
  %1360 = vst.msk [vmem:[%s5 + $0xf8] sm:$0xff] %vm1328, %v1165
  %1361 = vst.msk [vmem:[%s5 + $0x100] sm:$0xff] %vm1328, %v1170
  %1362 = vst.msk [vmem:[%s5 + $0x108] sm:$0xff] %vm1328, %v1175
  %1363 = vst.msk [vmem:[%s5 + $0x110] sm:$0xff] %vm1328, %v1180
  %1364 = vst.msk [vmem:[%s5 + $0x118] sm:$0xff] %vm1328, %v1185
  %1365 = vst.msk [vmem:[%s5 + $0x120] sm:$0xff] %vm1328, %v1190
  %1366 = vst.msk [vmem:[%s5 + $0x128] sm:$0xff] %vm1328, %v1195
  %1367 = vst.msk [vmem:[%s5 + $0x130] sm:$0xff] %vm1328, %v1200
  %1368 = vst.msk [vmem:[%s5 + $0x138] sm:$0xff] %vm1328, %v1205
  %1369 = vst.msk [vmem:[%s5 + $0x140] sm:$0xff] %vm1328, %v1210
  %1370 = vst.msk [vmem:[%s5 + $0x148] sm:$0xff] %vm1328, %v1215
  %1371 = vst.msk [vmem:[%s5 + $0x150] sm:$0xff] %vm1328, %v1220
  %1372 = vst.msk [vmem:[%s5 + $0x158] sm:$0xff] %vm1328, %v1225
  %1373 = vst.msk [vmem:[%s5 + $0x160] sm:$0xff] %vm1328, %v1230
  %1374 = vst.msk [vmem:[%s5 + $0x168] sm:$0xff] %vm1328, %v1235
  %1375 = vst.msk [vmem:[%s5 + $0x170] sm:$0xff] %vm1328, %v1240
  %1376 = vst.msk [vmem:[%s5 + $0x178] sm:$0xff] %vm1328, %v1245
  %1377 = vst.msk [vmem:[%s5 + $0x180] sm:$0xff] %vm1328, %v1250
  %1378 = vst.msk [vmem:[%s5 + $0x188] sm:$0xff] %vm1328, %v1255
  %1379 = vst.msk [vmem:[%s5 + $0x190] sm:$0xff] %vm1328, %v1260
  %1380 = vst.msk [vmem:[%s5 + $0x198] sm:$0xff] %vm1328, %v1265
  %1381 = vst.msk [vmem:[%s5 + $0x1a0] sm:$0xff] %vm1328, %v1270
  %1382 = vst.msk [vmem:[%s5 + $0x1a8] sm:$0xff] %vm1328, %v1275
  %1383 = vst.msk [vmem:[%s5 + $0x1b0] sm:$0xff] %vm1328, %v1280
  %1384 = vst.msk [vmem:[%s5 + $0x1b8] sm:$0xff] %vm1328, %v1285
  %1385 = vst.msk [vmem:[%s5 + $0x1c0] sm:$0xff] %vm1328, %v1290
  %1386 = vst.msk [vmem:[%s5 + $0x1c8] sm:$0xff] %vm1328, %v1295
  %1387 = vst.msk [vmem:[%s5 + $0x1d0] sm:$0xff] %vm1328, %v1300
  %1388 = vst.msk [vmem:[%s5 + $0x1d8] sm:$0xff] %vm1328, %v1305
  %1389 = vst.msk [vmem:[%s5 + $0x1e0] sm:$0xff] %vm1328, %v1310
  %1390 = vst.msk [vmem:[%s5 + $0x1e8] sm:$0xff] %vm1328, %v1315
  %1391 = vst.msk [vmem:[%s5 + $0x1f0] sm:$0xff] %vm1328, %v1320
  %1392 = vst.msk [vmem:[%s5 + $0x1f8] sm:$0xff] %vm1328, %v1325
  // Predicated region
  $region22: #{mlp_decoder.1} parent=0 // pred_check
    _
  $region23: #{mlp_decoder.1} parent=0 // pred_check_branch
    %1394 = sbr.rel (0) target = $region25
  $region24: #{mlp_decoder.1} parent=0 // pred_region
    _
  $region25: #{mlp_decoder.1} parent=0 // pred_fallthru
    _
  // Predicated region
  $region26: #{mlp_decoder.1} parent=0 // pred_check
    _
  $region27: #{mlp_decoder.1} parent=0 // pred_check_branch
    %1396 = sbr.rel (0) target = $region29
  $region28: #{mlp_decoder.1} parent=0 // pred_region
    _
  $region29: #{mlp_decoder.1} parent=0 // pred_fallthru
    _

</llo_original>
